<compile_context>
chip_gen: v7x
topology: tpu7x:2x2x1
jax: 0.10.0
libtpu: 0.0.40
codegen_flags: <defaults>
</compile_context>

<pallas_src>
import jax
import jax.numpy as jnp
from jax.experimental import pallas as pl
from jax.experimental.pallas import tpu as pltpu

VECT_DIM = 3
SEQ_LEN = 53
SEQ_PAD = 64                      # multiple of 16 (bf16 sublane tile) >= 53
VOCAB = 4
K1 = VOCAB * SEQ_PAD              # 256 = merged one-hot contraction dim
IN_DIM = SEQ_LEN * VECT_DIM       # 159
H1 = 20
H2 = 5
H3 = 1

LANE = 128
MAX_TB = 2048                     # per-tile intermediates ~1.2 MB -> tiny on all gens


def _round_up(x, m):
    return ((x + m - 1) // m) * m


def _fused_net_kernel(idx_ref, w1hi_ref, w1lo_ref, b1_ref, w2t_ref, b2_ref,
                      w3t_ref, b3_ref, o_ref):
    """One batch tile of the whole forward pass.

    idx_ref  : (64, TB) int8   token ids (rows 53..63 hold id 4 = "no token")
    w1hi_ref : (20, 256) bf16  embedding-folded layer-1 weights, high bf16 part
    w1lo_ref : (20, 256) bf16  low bf16 part (hi + lo ~= f32 slab)
    b1_ref   : (20, 1)  f32
    w2t_ref  : (5, 20)  f32    layer-2 weight, (out, in)
    b2_ref   : (5, 1)   f32
    w3t_ref  : (1, 5)   f32
    b3_ref   : (1, 1)   f32
    o_ref    : (1, TB)  f32    lane-dense output
    """
    idx = idx_ref[...].astype(jnp.int32)                         # (64, TB)

    # Merged one-hot RHS, rows ordered k = v*64 + s to match the packed W1 slab.
    # bool->f32->bf16 keeps to conversions known to lower on every generation;
    # the big (256, TB) array only ever exists in bf16.
    onehot = jnp.concatenate(
        [(idx == v).astype(jnp.float32).astype(jnp.bfloat16) for v in range(VOCAB)],
        axis=0)                                                  # (256, TB) bf16

    # Layer 1 fused with the embedding lookup, single-pass bf16 MXU, f32 accumulate.
    h1 = b1_ref[...]                                             # (20, 1), broadcasts
    h1 = h1 + jnp.dot(w1hi_ref[...], onehot,
                      preferred_element_type=jnp.float32)        # (20, TB)
    h1 = h1 + jnp.dot(w1lo_ref[...], onehot,
                      preferred_element_type=jnp.float32)        # hi/lo split -> ~f32 exact
    h1 = jnp.maximum(h1, 0.0)                                    # ReLU

    h2 = jnp.dot(w2t_ref[...], h1,
                 preferred_element_type=jnp.float32) + b2_ref[...]
    h2 = jnp.maximum(h2, 0.0)                                    # (5, TB)

    o_ref[...] = (jnp.dot(w3t_ref[...], h2,
                          preferred_element_type=jnp.float32)
                  + b3_ref[...])                                 # (1, TB)


def _fold_params(params):
    """Precompute the kernel-side parameter layout (tiny, one-time cost)."""
    emb, w1, b1, w2, b2, w3, b3 = params
    # W1v[v, s, j] = sum_d emb[v, d] * w1[s*3+d, j]  (elementwise mul + sum: exact f32)
    w1_r = w1.reshape(SEQ_LEN, VECT_DIM, H1)                          # (53, 3, 20)
    w1v = (emb[:, None, :, None] * w1_r[None, :, :, :]).sum(axis=2)   # (4, 53, 20)
    w1v = jnp.transpose(w1v, (0, 2, 1))                               # (4, 20, 53)
    w1v = jnp.pad(w1v, ((0, 0), (0, 0), (0, SEQ_PAD - SEQ_LEN)))      # (4, 20, 64)
    w1v = jnp.transpose(w1v, (1, 0, 2)).reshape(H1, K1)               # (20, 256), [j, v*64+s]

    # Two-term bf16 split: hi + lo reconstructs the f32 slab to ~1e-5 relative,
    # so layer 1 runs as single-pass bf16 MXU without giving up f32-level accuracy.
    w1hi = w1v.astype(jnp.bfloat16)
    w1lo = (w1v - w1hi.astype(jnp.float32)).astype(jnp.bfloat16)

    return (w1hi, w1lo,
            b1.reshape(H1, 1),
            w2.T,                                                     # (5, 20)
            b2.reshape(H2, 1),
            w3.T,                                                     # (1, 5)
            b3.reshape(H3, 1))


def net_forward(indices, params):
    """indices: integer array (53, B)  ->  f32 (B,)   (matches PyTorch Net.forward)."""
    w1hi, w1lo, b1c, w2t, b2c, w3t, b3c = _fold_params(params)

    batch = indices.shape[1]
    idx8 = indices.astype(jnp.int8)                     # vocab is 4 -> fits int8

    # Batch tile: multiple of 128 lanes, capped at 2048, and >= 2 grid steps once
    # batch >= 256 so both TensorCores of a v7x chip get work (v5e/v6e: no effect).
    if batch >= 2 * LANE:
        tb = min(MAX_TB, _round_up(pl.cdiv(batch, 2), LANE))
    else:
        tb = _round_up(batch, LANE)
    b_pad = _round_up(batch, tb)

    # Pad seq 53 -> 64 and batch -> b_pad with id VOCAB (=4): those positions fire
    # no one-hot row, so they contribute exactly zero to layer 1.
    idx8 = jnp.pad(idx8, ((0, SEQ_PAD - SEQ_LEN), (0, b_pad - batch)),
                   constant_values=VOCAB)

    const2 = lambda i: (0, 0)

    out = pl.pallas_call(
        _fused_net_kernel,
        out_shape=jax.ShapeDtypeStruct((H3, b_pad), jnp.float32),
        grid=(b_pad // tb,),
        in_specs=[
            pl.BlockSpec((SEQ_PAD, tb), lambda i: (0, i)),           # idx tile
            pl.BlockSpec((H1, K1), const2),                          # W1 hi (bf16)
            pl.BlockSpec((H1, K1), const2),                          # W1 lo (bf16)
            pl.BlockSpec((H1, 1), const2),                           # b1
            pl.BlockSpec((H2, H1), const2),                          # W2^T
            pl.BlockSpec((H2, 1), const2),                           # b2
            pl.BlockSpec((H3, H2), const2),                          # W3^T
            pl.BlockSpec((H3, 1), const2),                           # b3
        ],
        out_specs=pl.BlockSpec((H3, tb), lambda i: (0, i)),
        compiler_params=pltpu.CompilerParams(
            dimension_semantics=("parallel",)),                      # megacore sharding
    )(idx8, w1hi, w1lo, b1c, w2t, b2c, w3t, b3c)

    return out[0, :batch]                                            # (B,)


def init_params(key):
    """Deterministic init mirroring the shapes of Net.__init__ (not a checkpoint)."""
    k_emb, k1, k1b, k2, k2b, k3, k3b = jax.random.split(key, 7)
    emb = jax.random.normal(k_emb, (VOCAB, VECT_DIM), jnp.float32)   # nn.Embedding(4, 3)

    def linear(kw, kb, fan_in, fan_out):
        bound = 1.0 / jnp.sqrt(fan_in)
        w = jax.random.uniform(kw, (fan_in, fan_out), jnp.float32, -bound, bound)
        b = jax.random.uniform(kb, (1, fan_out), jnp.float32, -bound, bound)
        return w, b

    w1, b1 = linear(k1, k1b, IN_DIM, H1)    # nn.Linear(159, 20)
    w2, b2 = linear(k2, k2b, H1, H2)        # nn.Linear(20, 5)
    w3, b3 = linear(k3, k3b, H2, H3)        # nn.Linear(5, 1)
    return (emb, w1, b1, w2, b2, w3, b3)


def _reference_forward(indices, params):
    """Pure-JAX reference (gather path) for correctness check."""
    emb, w1, b1, w2, b2, w3, b3 = params
    hi = jax.lax.Precision.HIGHEST
    idx = indices.T
    x = emb[idx].reshape(idx.shape[0], -1)
    h1 = jnp.maximum(jnp.dot(x, w1, precision=hi) + b1, 0.0)
    h2 = jnp.maximum(jnp.dot(h1, w2, precision=hi) + b2, 0.0)
    return (jnp.dot(h2, w3, precision=hi) + b3).reshape(-1)


if __name__ == "__main__":
    key = jax.random.PRNGKey(0)
    k_params, k_idx = jax.random.split(key)

    params = init_params(k_params)

    batch = 8
    # Net expects input of shape (seq=53, batch) with integer token ids in [0, 4)
    indices = jax.random.randint(k_idx, (SEQ_LEN, batch), 0, VOCAB, dtype=jnp.int32)

    out = jax.block_until_ready(net_forward(indices, params))
    ref = _reference_forward(indices, params)

    assert out.shape == (batch,)
    # Embedding fold + hi/lo bf16 split keep layer-1 weights to ~1e-5 relative;
    # 5e-4 gives ample headroom over f32 accumulation-order differences.
    assert jnp.allclose(out, ref, atol=5e-4, rtol=5e-4), (out, ref)

    print("KERNEL_OK")
</pallas_src>

<mosaic_0001>
module attributes {stable_mosaic.version = 11 : i64} {
  func.func @_fused_net_kernel(%arg0: i32, %arg1: memref<64x128xi8, #tpu.memory_space<vmem>>, %arg2: memref<20x256xbf16, #tpu.memory_space<vmem>>, %arg3: memref<20x256xbf16, #tpu.memory_space<vmem>>, %arg4: memref<20x1xf32, #tpu.memory_space<vmem>>, %arg5: memref<5x20xf32, #tpu.memory_space<vmem>>, %arg6: memref<5x1xf32, #tpu.memory_space<vmem>>, %arg7: memref<1x5xf32, #tpu.memory_space<vmem>>, %arg8: memref<1x1xf32, #tpu.memory_space<vmem>>, %arg9: memref<1x128xf32, #tpu.memory_space<vmem>>) attributes {dimension_semantics = [#tpu.dimension_semantics<parallel>], iteration_bounds = array<i64: 1>, scalar_prefetch = 0 : i64, scratch_operands = 0 : i64, tpu.core_type = #tpu.core_type<tc>, window_params = [{transform_indices = @transform_0, window_bounds = array<i64: 64, 128>}, {pipeline_mode = #tpu.pipeline_mode<synchronous>, transform_indices = @transform_1, window_bounds = array<i64: 20, 256>}, {pipeline_mode = #tpu.pipeline_mode<synchronous>, transform_indices = @transform_2, window_bounds = array<i64: 20, 256>}, {pipeline_mode = #tpu.pipeline_mode<synchronous>, transform_indices = @transform_3, window_bounds = array<i64: 20, 1>}, {pipeline_mode = #tpu.pipeline_mode<synchronous>, transform_indices = @transform_4, window_bounds = array<i64: 5, 20>}, {pipeline_mode = #tpu.pipeline_mode<synchronous>, transform_indices = @transform_5, window_bounds = array<i64: 5, 1>}, {pipeline_mode = #tpu.pipeline_mode<synchronous>, transform_indices = @transform_6, window_bounds = array<i64: 1, 5>}, {pipeline_mode = #tpu.pipeline_mode<synchronous>, transform_indices = @transform_7, window_bounds = array<i64: 1, 1>}, {transform_indices = @transform_8, window_bounds = array<i64: 1, 128>}]} {
    %c0 = arith.constant 0 : index
    %c0_0 = arith.constant 0 : index
    %0 = vector.load %arg1[%c0, %c0_0] : memref<64x128xi8, #tpu.memory_space<vmem>>, vector<64x128xi8>
    %1 = arith.extsi %0 : vector<64x128xi8> to vector<64x128xi32>
    %c0_i32 = arith.constant 0 : i32
    %2 = vector.broadcast %c0_i32 : i32 to vector<64x128xi32>
    %3 = arith.cmpi eq, %1, %2 : vector<64x128xi32>
    %4 = arith.extui %3 : vector<64x128xi1> to vector<64x128xi32>
    %5 = arith.sitofp %4 : vector<64x128xi32> to vector<64x128xf32>
    %6 = arith.truncf %5 : vector<64x128xf32> to vector<64x128xbf16>
    %c1_i32 = arith.constant 1 : i32
    %7 = vector.broadcast %c1_i32 : i32 to vector<64x128xi32>
    %8 = arith.cmpi eq, %1, %7 : vector<64x128xi32>
    %9 = arith.extui %8 : vector<64x128xi1> to vector<64x128xi32>
    %10 = arith.sitofp %9 : vector<64x128xi32> to vector<64x128xf32>
    %11 = arith.truncf %10 : vector<64x128xf32> to vector<64x128xbf16>
    %c2_i32 = arith.constant 2 : i32
    %12 = vector.broadcast %c2_i32 : i32 to vector<64x128xi32>
    %13 = arith.cmpi eq, %1, %12 : vector<64x128xi32>
    %14 = arith.extui %13 : vector<64x128xi1> to vector<64x128xi32>
    %15 = arith.sitofp %14 : vector<64x128xi32> to vector<64x128xf32>
    %16 = arith.truncf %15 : vector<64x128xf32> to vector<64x128xbf16>
    %c3_i32 = arith.constant 3 : i32
    %17 = vector.broadcast %c3_i32 : i32 to vector<64x128xi32>
    %18 = arith.cmpi eq, %1, %17 : vector<64x128xi32>
    %19 = arith.extui %18 : vector<64x128xi1> to vector<64x128xi32>
    %20 = arith.sitofp %19 : vector<64x128xi32> to vector<64x128xf32>
    %21 = arith.truncf %20 : vector<64x128xf32> to vector<64x128xbf16>
    %22 = tpu.concatenate %6, %11, %16, %21 in 0 : vector<64x128xbf16>, vector<64x128xbf16>, vector<64x128xbf16>, vector<64x128xbf16> -> vector<256x128xbf16>
    %c0_1 = arith.constant 0 : index
    %c0_2 = arith.constant 0 : index
    %23 = vector.load %arg4[%c0_1, %c0_2] : memref<20x1xf32, #tpu.memory_space<vmem>>, vector<20x1xf32>
    %c0_3 = arith.constant 0 : index
    %c0_4 = arith.constant 0 : index
    %24 = vector.load %arg2[%c0_3, %c0_4] : memref<20x256xbf16, #tpu.memory_space<vmem>>, vector<20x256xbf16>
    %cst = arith.constant dense<0.000000e+00> : vector<20x128xf32>
    %25 = tpu.matmul %24, %22, %cst {dimension_numbers = #tpu.dot_dimension_numbers<[1], [0], [0], [1], [0, 0, 1, 1], [], []>} : vector<20x256xbf16>, vector<256x128xbf16>, vector<20x128xf32> -> vector<20x128xf32>
    %26 = vector.broadcast %23 : vector<20x1xf32> to vector<20x128xf32>
    %27 = arith.addf %26, %25 : vector<20x128xf32>
    %c0_5 = arith.constant 0 : index
    %c0_6 = arith.constant 0 : index
    %28 = vector.load %arg3[%c0_5, %c0_6] : memref<20x256xbf16, #tpu.memory_space<vmem>>, vector<20x256xbf16>
    %cst_7 = arith.constant dense<0.000000e+00> : vector<20x128xf32>
    %29 = tpu.matmul %28, %22, %cst_7 {dimension_numbers = #tpu.dot_dimension_numbers<[1], [0], [0], [1], [0, 0, 1, 1], [], []>} : vector<20x256xbf16>, vector<256x128xbf16>, vector<20x128xf32> -> vector<20x128xf32>
    %30 = arith.addf %27, %29 : vector<20x128xf32>
    %cst_8 = arith.constant 0.000000e+00 : f32
    %31 = vector.broadcast %cst_8 : f32 to vector<20x128xf32>
    %32 = arith.maximumf %30, %31 : vector<20x128xf32>
    %c0_9 = arith.constant 0 : index
    %c0_10 = arith.constant 0 : index
    %33 = vector.load %arg5[%c0_9, %c0_10] : memref<5x20xf32, #tpu.memory_space<vmem>>, vector<5x20xf32>
    %cst_11 = arith.constant dense<0.000000e+00> : vector<5x128xf32>
    %34 = tpu.matmul %33, %32, %cst_11 {dimension_numbers = #tpu.dot_dimension_numbers<[1], [0], [0], [1], [0, 0, 1, 1], [], []>} : vector<5x20xf32>, vector<20x128xf32>, vector<5x128xf32> -> vector<5x128xf32>
    %c0_12 = arith.constant 0 : index
    %c0_13 = arith.constant 0 : index
    %35 = vector.load %arg6[%c0_12, %c0_13] : memref<5x1xf32, #tpu.memory_space<vmem>>, vector<5x1xf32>
    %36 = vector.broadcast %35 : vector<5x1xf32> to vector<5x128xf32>
    %37 = arith.addf %34, %36 : vector<5x128xf32>
    %cst_14 = arith.constant 0.000000e+00 : f32
    %38 = vector.broadcast %cst_14 : f32 to vector<5x128xf32>
    %39 = arith.maximumf %37, %38 : vector<5x128xf32>
    %c0_15 = arith.constant 0 : index
    %c0_16 = arith.constant 0 : index
    %40 = vector.load %arg7[%c0_15, %c0_16] : memref<1x5xf32, #tpu.memory_space<vmem>>, vector<1x5xf32>
    %cst_17 = arith.constant dense<0.000000e+00> : vector<1x128xf32>
    %41 = tpu.matmul %40, %39, %cst_17 {dimension_numbers = #tpu.dot_dimension_numbers<[1], [0], [0], [1], [0, 0, 1, 1], [], []>} : vector<1x5xf32>, vector<5x128xf32>, vector<1x128xf32> -> vector<1x128xf32>
    %c0_18 = arith.constant 0 : index
    %c0_19 = arith.constant 0 : index
    %42 = vector.load %arg8[%c0_18, %c0_19] : memref<1x1xf32, #tpu.memory_space<vmem>>, vector<1x1xf32>
    %43 = vector.broadcast %42 : vector<1x1xf32> to vector<1x128xf32>
    %44 = arith.addf %41, %43 : vector<1x128xf32>
    %c0_20 = arith.constant 0 : index
    %c0_21 = arith.constant 0 : index
    %45 = vector.load %arg9[%c0_20, %c0_21] : memref<1x128xf32, #tpu.memory_space<vmem>>, vector<1x128xf32>
    tpu.vector_store %arg9[%c0_20, %c0_21], %44 {strides = array<i32>} : memref<1x128xf32, #tpu.memory_space<vmem>>, vector<1x128xf32>,
    return
  }
  func.func @transform_0(%arg0: i32) -> (i32, i32) {
    %c0_i32 = arith.constant 0 : i32
    %c0_i32_0 = arith.constant 0 : i32
    return %c0_i32, %arg0 : i32, i32
  }
  func.func @transform_1(%arg0: i32) -> (i32, i32) {
    %c0_i32 = arith.constant 0 : i32
    %c0_i32_0 = arith.constant 0 : i32
    %c0_i32_1 = arith.constant 0 : i32
    return %c0_i32, %c0_i32_0 : i32, i32
  }
  func.func @transform_2(%arg0: i32) -> (i32, i32) {
    %c0_i32 = arith.constant 0 : i32
    %c0_i32_0 = arith.constant 0 : i32
    %c0_i32_1 = arith.constant 0 : i32
    return %c0_i32, %c0_i32_0 : i32, i32
  }
  func.func @transform_3(%arg0: i32) -> (i32, i32) {
    %c0_i32 = arith.constant 0 : i32
    %c0_i32_0 = arith.constant 0 : i32
    %c0_i32_1 = arith.constant 0 : i32
    return %c0_i32, %c0_i32_0 : i32, i32
  }
  func.func @transform_4(%arg0: i32) -> (i32, i32) {
    %c0_i32 = arith.constant 0 : i32
    %c0_i32_0 = arith.constant 0 : i32
    %c0_i32_1 = arith.constant 0 : i32
    return %c0_i32, %c0_i32_0 : i32, i32
  }
  func.func @transform_5(%arg0: i32) -> (i32, i32) {
    %c0_i32 = arith.constant 0 : i32
    %c0_i32_0 = arith.constant 0 : i32
    %c0_i32_1 = arith.constant 0 : i32
    return %c0_i32, %c0_i32_0 : i32, i32
  }
  func.func @transform_6(%arg0: i32) -> (i32, i32) {
    %c0_i32 = arith.constant 0 : i32
    %c0_i32_0 = arith.constant 0 : i32
    %c0_i32_1 = arith.constant 0 : i32
    return %c0_i32, %c0_i32_0 : i32, i32
  }
  func.func @transform_7(%arg0: i32) -> (i32, i32) {
    %c0_i32 = arith.constant 0 : i32
    %c0_i32_0 = arith.constant 0 : i32
    %c0_i32_1 = arith.constant 0 : i32
    return %c0_i32, %c0_i32_0 : i32, i32
  }
  func.func @transform_8(%arg0: i32) -> (i32, i32) {
    %c0_i32 = arith.constant 0 : i32
    %c0_i32_0 = arith.constant 0 : i32
    return %c0_i32, %arg0 : i32, i32
  }
}

</mosaic_0001>

<llo_original>
// kernel: tpu_custom_call.1
$region0: #{tpu_custom_call.1}
  #allocation0 [shape = 'u32[]', space=smem, size = 0x4, offset = 0x4, fixed_abs, tag = 'smem constant byte address 0x4 - core index']
  #allocation1 [shape = 'u32[144,128]{1,0:T(1,128)}', space=vmem, size = 0x12000, scoped, tag = 'internal scratch']
  #allocation2 [shape = 'f32[1,1]{1,0:T(1,128)S(1)}', space=vmem, size = 0x200, scoped, tag = 'scoped memory for tpu_custom_call.1']
  %s0 = inlined_call_operand.vmem [shape: s8[64,128], index: 0, kind: input, shape index: {}]
  %s1 = inlined_call_operand.vmem [shape: bf16[20,256], index: 1, kind: input, shape index: {}]
  %s2 = inlined_call_operand.hbm [shape: bf16[20,256], index: 2, kind: input, shape index: {}]
  %s3 = inlined_call_operand.vmem [shape: f32[20,1], index: 3, kind: input, shape index: {}]
  %s4 = inlined_call_operand.vmem [shape: f32[5,20], index: 4, kind: input, shape index: {}]
  %s5 = inlined_call_operand.vmem [shape: f32[5,1], index: 5, kind: input, shape index: {}]
  %s6 = inlined_call_operand.vmem [shape: f32[1,5], index: 6, kind: input, shape index: {}]
  %s7 = inlined_call_operand.<no memory space> [shape: f32[1,1], index: 7, kind: input, shape index: {}]
  %s8 = inlined_call_operand.hbm [shape: f32[1,128], index: 8, kind: output, shape index: {}]
  %s9 = sld [smem:[#allocation0]]
  $region46: #{tpu_custom_call.1} parent=0
    _
  %s11 = ssub.s32 1, %s9
  %s12 = scalar_select 0, %s11, %s9
  %v13 = vstv %s7
  %14 = vst [vmem:[#allocation2] sm:$0x1] %v13
  $region1: #{tpu_custom_call.1} parent=0
    #allocation3 [shape = 'u8[12288]{0}', space=vmem, size = 0x3000, scoped, tag = 'input window, operand 2, single buffered']
    #allocation4 [shape = 's32[1]{0}', space=sflag, size = 0x4, scoped, tag = 'scoped memory for tpu_custom_call.1']
    #allocation5 [shape = 's32[1]{0}', space=sflag, size = 0x4, scoped, tag = 'scoped memory for tpu_custom_call.1']
    #allocation6 [shape = 'u8[512]{0}', space=vmem, size = 0x400, scoped, tag = 'output window, operand 0, single buffered']
    %15 = vsyncpa [#allocation4], 0
    %16 = vsyncpa [#allocation5], 0
    // Predicated region
    $region2: #{tpu_custom_call.1} parent=1 // pred_check
      _
    $region3: #{tpu_custom_call.1} parent=1 // pred_check_branch
      %18 = sbr.rel (0) target = $region5
    $region4: #{tpu_custom_call.1} parent=1 // pred_region
      _
    $region5: #{tpu_custom_call.1} parent=1 // pred_fallthru
      _
    // Predicated region
    $region6: #{tpu_custom_call.1} parent=1 // pred_check
      _
    $region7: #{tpu_custom_call.1} parent=1 // pred_check_branch
      %20 = sbr.rel (0) target = $region9
    $region8: #{tpu_custom_call.1} parent=1 // pred_region
      _
    $region9: #{tpu_custom_call.1} parent=1 // pred_fallthru
      _
    // Predicated region
    $region10: #{tpu_custom_call.1} parent=1 // pred_check
      _
    $region11: #{tpu_custom_call.1} parent=1 // pred_check_branch
      %22 = sbr.rel (0) target = $region13
    $region12: #{tpu_custom_call.1} parent=1 // pred_region
      %s24 = ssub.s32 384, 384
      %25 = vsyncadd [#allocation4], %s24
      %s26 = sshll.u32 [#allocation3], 4
      %s27 = int_to_ptr.vmem [resolvable:$true] %s26
      %32 = dma.hbm_to_vmem [thread:$0]  %s2, 384, %s27, [#allocation4], 128, 128, 8
    $region13: #{tpu_custom_call.1} parent=1 // pred_fallthru
      _
    // Predicated region
    $region14: #{tpu_custom_call.1} parent=1 // pred_check
      _
    $region15: #{tpu_custom_call.1} parent=1 // pred_check_branch
      %34 = sbr.rel (0) target = $region17
    $region16: #{tpu_custom_call.1} parent=1 // pred_region
      _
    $region17: #{tpu_custom_call.1} parent=1 // pred_fallthru
      _
    // Predicated region
    $region18: #{tpu_custom_call.1} parent=1 // pred_check
      _
    $region19: #{tpu_custom_call.1} parent=1 // pred_check_branch
      %36 = sbr.rel (0) target = $region21
    $region20: #{tpu_custom_call.1} parent=1 // pred_region
      _
    $region21: #{tpu_custom_call.1} parent=1 // pred_fallthru
      _
    // Predicated region
    $region22: #{tpu_custom_call.1} parent=1 // pred_check
      _
    $region23: #{tpu_custom_call.1} parent=1 // pred_check_branch
      %38 = sbr.rel (0) target = $region25
    $region24: #{tpu_custom_call.1} parent=1 // pred_region
      _
    $region25: #{tpu_custom_call.1} parent=1 // pred_fallthru
      _
    // Predicated region
    $region26: #{tpu_custom_call.1} parent=1 // pred_check
      _
    $region27: #{tpu_custom_call.1} parent=1 // pred_check_branch
      %40 = sbr.rel (0) target = $region29
    $region28: #{tpu_custom_call.1} parent=1 // pred_region
      _
    $region29: #{tpu_custom_call.1} parent=1 // pred_fallthru
      _
    // Predicated region
    $region30: #{tpu_custom_call.1} parent=1 // pred_check
      _
    $region31: #{tpu_custom_call.1} parent=1 // pred_check_branch
      %42 = sbr.rel (0) target = $region33
    $region32: #{tpu_custom_call.1} parent=1 // pred_region
      _
    $region33: #{tpu_custom_call.1} parent=1 // pred_fallthru
      _
    // Predicated region
    $region34: #{tpu_custom_call.1} parent=1 // pred_check
      _
    $region35: #{tpu_custom_call.1} parent=1 // pred_check_branch
      %44 = sbr.rel (0) target = $region37
    $region36: #{tpu_custom_call.1} parent=1 // pred_region
      %45 = dma.done [#allocation4], 384
    $region37: #{tpu_custom_call.1} parent=1 // pred_fallthru
      _
    %v47 = vld [vmem:[%s0] sm:$0xff]
    %v48 = vld [vmem:[%s0 + $0x8] sm:$0xff]
    %v49 = vunpack.c.0.s8 %v47
    %v50 = vunpack.c.1.s8 %v47
    %v51 = vunpack.c.2.s8 %v47
    %v52 = vunpack.c.3.s8 %v47
    %v53 = vunpack.c.0.s8 %v48
    %v54 = vunpack.c.1.s8 %v48
    %v55 = vunpack.c.2.s8 %v48
    %v56 = vunpack.c.3.s8 %v48
    %vm57 = vcmp.eq.s32.totalorder %v49, 0
    %vm58 = vcmp.eq.s32.totalorder %v50, 0
    %vm59 = vcmp.eq.s32.totalorder %v51, 0
    %vm60 = vcmp.eq.s32.totalorder %v52, 0
    %vm61 = vcmp.eq.s32.totalorder %v53, 0
    %vm62 = vcmp.eq.s32.totalorder %v54, 0
    %vm63 = vcmp.eq.s32.totalorder %v55, 0
    %vm64 = vcmp.eq.s32.totalorder %v56, 0
    %v65 = vsel %vm57, 1, 0
    %v66 = vsel %vm58, 1, 0
    %v67 = vsel %vm59, 1, 0
    %v68 = vsel %vm60, 1, 0
    %v69 = vsel %vm61, 1, 0
    %v70 = vsel %vm62, 1, 0
    %v71 = vsel %vm63, 1, 0
    %v72 = vsel %vm64, 1, 0
    %v73 = vcvt.s32.f32 %v65
    %v74 = vcvt.s32.f32 %v66
    %v75 = vcvt.s32.f32 %v67
    %v76 = vcvt.s32.f32 %v68
    %v77 = vcvt.s32.f32 %v69
    %v78 = vcvt.s32.f32 %v70
    %v79 = vcvt.s32.f32 %v71
    %v80 = vcvt.s32.f32 %v72
    %v81 = vpack.c.bf16 %v74, %v73
    %v82 = vpack.c.bf16 %v76, %v75
    %v83 = vpack.c.bf16 %v78, %v77
    %v84 = vpack.c.bf16 %v80, %v79
    %vm85 = vcmp.eq.s32.totalorder %v49, 1
    %vm86 = vcmp.eq.s32.totalorder %v50, 1
    %vm87 = vcmp.eq.s32.totalorder %v51, 1
    %vm88 = vcmp.eq.s32.totalorder %v52, 1
    %vm89 = vcmp.eq.s32.totalorder %v53, 1
    %vm90 = vcmp.eq.s32.totalorder %v54, 1
    %vm91 = vcmp.eq.s32.totalorder %v55, 1
    %vm92 = vcmp.eq.s32.totalorder %v56, 1
    %v93 = vsel %vm85, 1, 0
    %v94 = vsel %vm86, 1, 0
    %v95 = vsel %vm87, 1, 0
    %v96 = vsel %vm88, 1, 0
    %v97 = vsel %vm89, 1, 0
    %v98 = vsel %vm90, 1, 0
    %v99 = vsel %vm91, 1, 0
    %v100 = vsel %vm92, 1, 0
    %v101 = vcvt.s32.f32 %v93
    %v102 = vcvt.s32.f32 %v94
    %v103 = vcvt.s32.f32 %v95
    %v104 = vcvt.s32.f32 %v96
    %v105 = vcvt.s32.f32 %v97
    %v106 = vcvt.s32.f32 %v98
    %v107 = vcvt.s32.f32 %v99
    %v108 = vcvt.s32.f32 %v100
    %v109 = vpack.c.bf16 %v102, %v101
    %v110 = vpack.c.bf16 %v104, %v103
    %v111 = vpack.c.bf16 %v106, %v105
    %v112 = vpack.c.bf16 %v108, %v107
    %vm113 = vcmp.eq.s32.totalorder %v49, 2
    %vm114 = vcmp.eq.s32.totalorder %v50, 2
    %vm115 = vcmp.eq.s32.totalorder %v51, 2
    %vm116 = vcmp.eq.s32.totalorder %v52, 2
    %vm117 = vcmp.eq.s32.totalorder %v53, 2
    %vm118 = vcmp.eq.s32.totalorder %v54, 2
    %vm119 = vcmp.eq.s32.totalorder %v55, 2
    %vm120 = vcmp.eq.s32.totalorder %v56, 2
    %v121 = vsel %vm113, 1, 0
    %v122 = vsel %vm114, 1, 0
    %v123 = vsel %vm115, 1, 0
    %v124 = vsel %vm116, 1, 0
    %v125 = vsel %vm117, 1, 0
    %v126 = vsel %vm118, 1, 0
    %v127 = vsel %vm119, 1, 0
    %v128 = vsel %vm120, 1, 0
    %v129 = vcvt.s32.f32 %v121
    %v130 = vcvt.s32.f32 %v122
    %v131 = vcvt.s32.f32 %v123
    %v132 = vcvt.s32.f32 %v124
    %v133 = vcvt.s32.f32 %v125
    %v134 = vcvt.s32.f32 %v126
    %v135 = vcvt.s32.f32 %v127
    %v136 = vcvt.s32.f32 %v128
    %v137 = vpack.c.bf16 %v130, %v129
    %v138 = vpack.c.bf16 %v132, %v131
    %v139 = vpack.c.bf16 %v134, %v133
    %v140 = vpack.c.bf16 %v136, %v135
    %vm141 = vcmp.eq.s32.totalorder %v49, 3
    %vm142 = vcmp.eq.s32.totalorder %v50, 3
    %vm143 = vcmp.eq.s32.totalorder %v51, 3
    %vm144 = vcmp.eq.s32.totalorder %v52, 3
    %vm145 = vcmp.eq.s32.totalorder %v53, 3
    %vm146 = vcmp.eq.s32.totalorder %v54, 3
    %vm147 = vcmp.eq.s32.totalorder %v55, 3
    %vm148 = vcmp.eq.s32.totalorder %v56, 3
    %v149 = vsel %vm141, 1, 0
    %v150 = vsel %vm142, 1, 0
    %v151 = vsel %vm143, 1, 0
    %v152 = vsel %vm144, 1, 0
    %v153 = vsel %vm145, 1, 0
    %v154 = vsel %vm146, 1, 0
    %v155 = vsel %vm147, 1, 0
    %v156 = vsel %vm148, 1, 0
    %v157 = vcvt.s32.f32 %v149
    %v158 = vcvt.s32.f32 %v150
    %v159 = vcvt.s32.f32 %v151
    %v160 = vcvt.s32.f32 %v152
    %v161 = vcvt.s32.f32 %v153
    %v162 = vcvt.s32.f32 %v154
    %v163 = vcvt.s32.f32 %v155
    %v164 = vcvt.s32.f32 %v156
    %v165 = vpack.c.bf16 %v158, %v157
    %v166 = vpack.c.bf16 %v160, %v159
    %v167 = vpack.c.bf16 %v162, %v161
    %v168 = vpack.c.bf16 %v164, %v163
    %v169 = vld [vmem:[%s3] sm:$0xff]
    %v170 = vld [vmem:[%s3 + $0x8] sm:$0xff]
    %v171 = vld [vmem:[%s3 + $0x10] sm:$0xf]
    %v172 = vld [vmem:[%s1] sm:$0xff]
    %v173 = vld [vmem:[%s1 + $0x8] sm:$0xff]
    %v174 = vld [vmem:[%s1 + $0x10] sm:$0x33]
    %v178 = vunpack.c.l.b16 %v172
    %v179 = vunpack.c.h.b16 %v172
    %v180 = vunpack.c.l.b16 %v173
    %v181 = vunpack.c.h.b16 %v173
    %v182 = vunpack.c.l.b16 %v174
    %v183 = vunpack.c.h.b16 %v174
    %v184 = vpack.c.b16 %v180, %v178
    %v185 = vpack.c.b16 %v181, %v179
    %v186 = vpack.c.b16 %v182, %v182
    %v187 = vpack.c.b16 %v183, %v183
    %192 = vmatprep.subr.bf16.mxu0 0
    %193 = vmatpush1.bf16.msra.mxu0 %v81
    %194 = vmatprep.subr.bf16.mxu0 0
    %195 = vmatpush1.bf16.msra.mxu0 %v82
    %196 = vmatprep.subr.bf16.mxu0 0
    %197 = vmatpush1.bf16.msra.mxu0 %v83
    %198 = vmatprep.subr.bf16.mxu0 0
    %199 = vmatpush1.bf16.msra.mxu0 %v84
    %200 = vmatprep.subr.bf16.mxu0 0
    %201 = vmatpush1.bf16.msra.mxu0 %v109
    %202 = vmatprep.subr.bf16.mxu0 0
    %203 = vmatpush1.bf16.msra.mxu0 %v110
    %204 = vmatprep.subr.bf16.mxu0 0
    %205 = vmatpush1.bf16.msra.mxu0 %v111
    %206 = vmatprep.subr.bf16.mxu0 0
    %207 = vmatpush1.bf16.msra.mxu0 %v112
    %208 = vmatprep.subr.bf16.mxu0 0
    %209 = vmatpush1.bf16.msra.mxu0 %v137
    %210 = vmatprep.subr.bf16.mxu0 0
    %211 = vmatpush1.bf16.msra.mxu0 %v138
    %212 = vmatprep.subr.bf16.mxu0 0
    %213 = vmatpush1.bf16.msra.mxu0 %v139
    %214 = vmatprep.subr.bf16.mxu0 0
    %215 = vmatpush1.bf16.msra.mxu0 %v140
    %216 = vmatprep.subr.bf16.mxu0 0
    %217 = vmatpush1.bf16.msra.mxu0 %v165
    %218 = vmatprep.subr.bf16.mxu0 0
    %219 = vmatpush1.bf16.msra.mxu0 %v166
    %220 = vmatprep.subr.bf16.mxu0 0
    %221 = vmatpush1.bf16.msra.mxu0 %v167
    %222 = vmatprep.subr.bf16.mxu0 0
    %223 = vmatpush1.bf16.msra.mxu0 %v168
    %224 = vmatprep.mubr.bf16.mxu0 %v185
    %225 = vmatmul.mubr.bf16.gmra.mrb[0].mxu0 %v184
    %v226 = vpop.f32.mrb[0].mxu0
    %v227 = vadd.f32 0.0, %v226
    %v228 = vpop.f32.mrb[0].mxu0
    %v229 = vpop.f32.mrb[0].mxu0
    %v230 = vadd.f32 0.0, %v229
    %v231 = vpop.f32.mrb[0].mxu0
    %232 = vmatprep.mubr.bf16.mxu0 %v187
    %233 = vmatmul.mubr.bf16.gmra.mrb[0].mxu0 %v186
    %v234 = vpop.f32.mrb[0].mxu0
    %v235 = vadd.f32 0.0, %v234
    %v236 = vpop.f32.mrb[0].mxu0
    %v237 = vpop.f32.mrb[0].mxu0
    %v238 = vpop.f32.mrb[0].mxu0
    %239 = vdwg.mxu0
    %241 = vset.pattern.permute.xlu0 0
    %242 = vperm.xlu0 %241, %v169
    %v243 = vpop.permute.xlu0 %242
    %246 = vset.pattern.permute.xlu0 0
    %247 = vperm.xlu0 %246, %v170
    %v248 = vpop.permute.xlu0 %247
    %251 = vset.pattern.permute.xlu0 0
    %252 = vperm.xlu0 %251, %v171
    %v253 = vpop.permute.xlu0 %252
    %v255 = vadd.f32 %v243, %v227
    %v256 = vadd.f32 %v248, %v230
    %v257 = vadd.f32 %v253, %v235
    %v258 = vld [vmem:[#allocation3] sm:$0xff]
    %v259 = vld [vmem:[#allocation3 + $0x8] sm:$0xff]
    %v260 = vld [vmem:[#allocation3 + $0x10] sm:$0x33]
    %v264 = vunpack.c.l.b16 %v258
    %v265 = vunpack.c.h.b16 %v258
    %v266 = vunpack.c.l.b16 %v259
    %v267 = vunpack.c.h.b16 %v259
    %v268 = vunpack.c.l.b16 %v260
    %v269 = vunpack.c.h.b16 %v260
    %v270 = vpack.c.b16 %v266, %v264
    %v271 = vpack.c.b16 %v267, %v265
    %v272 = vpack.c.b16 %v268, %v268
    %v273 = vpack.c.b16 %v269, %v269
    %278 = vmatprep.subr.bf16.mxu0 0
    %279 = vmatpush1.bf16.msra.mxu0 %v81
    %280 = vmatprep.subr.bf16.mxu0 0
    %281 = vmatpush1.bf16.msra.mxu0 %v82
    %282 = vmatprep.subr.bf16.mxu0 0
    %283 = vmatpush1.bf16.msra.mxu0 %v83
    %284 = vmatprep.subr.bf16.mxu0 0
    %285 = vmatpush1.bf16.msra.mxu0 %v84
    %286 = vmatprep.subr.bf16.mxu0 0
    %287 = vmatpush1.bf16.msra.mxu0 %v109
    %288 = vmatprep.subr.bf16.mxu0 0
    %289 = vmatpush1.bf16.msra.mxu0 %v110
    %290 = vmatprep.subr.bf16.mxu0 0
    %291 = vmatpush1.bf16.msra.mxu0 %v111
    %292 = vmatprep.subr.bf16.mxu0 0
    %293 = vmatpush1.bf16.msra.mxu0 %v112
    %294 = vmatprep.subr.bf16.mxu0 0
    %295 = vmatpush1.bf16.msra.mxu0 %v137
    %296 = vmatprep.subr.bf16.mxu0 0
    %297 = vmatpush1.bf16.msra.mxu0 %v138
    %298 = vmatprep.subr.bf16.mxu0 0
    %299 = vmatpush1.bf16.msra.mxu0 %v139
    %300 = vmatprep.subr.bf16.mxu0 0
    %301 = vmatpush1.bf16.msra.mxu0 %v140
    %302 = vmatprep.subr.bf16.mxu0 0
    %303 = vmatpush1.bf16.msra.mxu0 %v165
    %304 = vmatprep.subr.bf16.mxu0 0
    %305 = vmatpush1.bf16.msra.mxu0 %v166
    %306 = vmatprep.subr.bf16.mxu0 0
    %307 = vmatpush1.bf16.msra.mxu0 %v167
    %308 = vmatprep.subr.bf16.mxu0 0
    %309 = vmatpush1.bf16.msra.mxu0 %v168
    %310 = vmatprep.mubr.bf16.mxu0 %v271
    %311 = vmatmul.mubr.bf16.gmra.mrb[0].mxu0 %v270
    %v312 = vpop.f32.mrb[0].mxu0
    %v313 = vadd.f32 0.0, %v312
    %v314 = vpop.f32.mrb[0].mxu0
    %v315 = vpop.f32.mrb[0].mxu0
    %v316 = vadd.f32 0.0, %v315
    %v317 = vpop.f32.mrb[0].mxu0
    %318 = vmatprep.mubr.bf16.mxu0 %v273
    %319 = vmatmul.mubr.bf16.gmra.mrb[0].mxu0 %v272
    %v320 = vpop.f32.mrb[0].mxu0
    %v321 = vadd.f32 0.0, %v320
    %v322 = vpop.f32.mrb[0].mxu0
    %v323 = vpop.f32.mrb[0].mxu0
    %v324 = vpop.f32.mrb[0].mxu0
    %325 = vdwg.mxu0
    %v326 = vadd.f32 %v255, %v313
    %v327 = vadd.f32 %v256, %v316
    %v328 = vadd.f32 %v257, %v321
    %v329 = vmax.f32 %v326, 0.0
    %v330 = vmax.f32 %v327, 0.0
    %v331 = vmax.f32 %v328, 0.0
    %v332 = vld [vmem:[%s4] sm:$0x1f]
    %v333 = vld [vmem:[%s5] sm:$0x1f]
    %335 = vset.pattern.permute.xlu0 0
    %336 = vperm.xlu0 %335, %v333
    %v337 = vpop.permute.xlu0 %336
    %vm339 = vcmask 162816
    %v341 = vsel %vm339, %v332, 0
    %vm343 = vcmask 1043456
    %v345 = vsel %vm343, %v331, 0
    %347 = vmatprep.subr.mxu0 0.0
    %348 = vmatpush1.msra.mxu0 %v329
    %349 = vmatprep.subr.mxu0 0.0
    %350 = vmatpush1.msra.mxu0 %v330
    %351 = vmatprep.subr.mxu0 0.0
    %352 = vmatpush1.msra.mxu0 %v345
    %353 = vmatprep.subr.mxu0 0.0
    %354 = vmatpush1.msra.mxu0 0.0
    %355 = vmatprep.subr.mxu0 0.0
    %356 = vmatpush1.msra.mxu0 0.0
    %357 = vmatprep.subr.mxu0 0.0
    %358 = vmatpush1.msra.mxu0 0.0
    %359 = vmatprep.subr.mxu0 0.0
    %360 = vmatpush1.msra.mxu0 0.0
    %361 = vmatprep.subr.mxu0 0.0
    %362 = vmatpush1.msra.mxu0 0.0
    %363 = vmatprep.subr.mxu0 0.0
    %364 = vmatpush1.msra.mxu0 0.0
    %365 = vmatprep.subr.mxu0 0.0
    %366 = vmatpush1.msra.mxu0 0.0
    %367 = vmatprep.subr.mxu0 0.0
    %368 = vmatpush1.msra.mxu0 0.0
    %369 = vmatprep.subr.mxu0 0.0
    %370 = vmatpush1.msra.mxu0 0.0
    %371 = vmatprep.subr.mxu0 0.0
    %372 = vmatpush1.msra.mxu0 0.0
    %373 = vmatprep.subr.mxu0 0.0
    %374 = vmatpush1.msra.mxu0 0.0
    %375 = vmatprep.subr.mxu0 0.0
    %376 = vmatpush1.msra.mxu0 0.0
    %377 = vmatprep.subr.mxu0 0.0
    %378 = vmatpush1.msra.mxu0 0.0
    %379 = vmatprep.subr.mxu0 0.0
    %380 = vmatpush1.msra.mxu0 0.0
    %381 = vmatprep.subr.mxu0 0.0
    %382 = vmatpush1.msra.mxu0 0.0
    %383 = vmatprep.subr.mxu0 0.0
    %384 = vmatpush1.msra.mxu0 0.0
    %385 = vmatprep.subr.mxu0 0.0
    %386 = vmatpush1.msra.mxu0 0.0
    %387 = vmatprep.subr.mxu0 0.0
    %388 = vmatpush1.msra.mxu0 0.0
    %389 = vmatprep.subr.mxu0 0.0
    %390 = vmatpush1.msra.mxu0 0.0
    %391 = vmatprep.subr.mxu0 0.0
    %392 = vmatpush1.msra.mxu0 0.0
    %393 = vmatprep.subr.mxu0 0.0
    %394 = vmatpush1.msra.mxu0 0.0
    %395 = vmatprep.subr.mxu0 0.0
    %396 = vmatpush1.msra.mxu0 0.0
    %397 = vmatprep.subr.mxu0 0.0
    %398 = vmatpush1.msra.mxu0 0.0
    %399 = vmatprep.subr.mxu0 0.0
    %400 = vmatpush1.msra.mxu0 0.0
    %401 = vmatprep.subr.mxu0 0.0
    %402 = vmatpush1.msra.mxu0 0.0
    %403 = vmatprep.subr.mxu0 0.0
    %404 = vmatpush1.msra.mxu0 0.0
    %405 = vmatprep.subr.mxu0 0.0
    %406 = vmatpush1.msra.mxu0 0.0
    %407 = vmatprep.subr.mxu0 0.0
    %408 = vmatpush1.msra.mxu0 0.0
    %409 = vmatprep.subr.mxu0 0.0
    %410 = vmatpush1.msra.mxu0 0.0
    %411 = vmatprep.mubr.f32.mxu0 0.0
    %412 = vmatmul.mubr.f32.gmra.mrb[0].mxu0 %v341
    %v413 = vpop.f32.mrb[0].mxu0
    %v414 = vadd.f32 %v337, %v413
    %v415 = vpop.f32.mrb[0].mxu0
    %416 = vdwg.mxu0
    %v417 = vmax.f32 %v414, 0.0
    %v418 = vld [vmem:[%s6] sm:$0x1]
    %v419 = vld [vmem:[#allocation2] sm:$0x1]
    %421 = vset.pattern.permute.xlu0 0
    %422 = vperm.xlu0 %421, %v419
    %v423 = vpop.permute.xlu0 %422
    %v425 = vlaneseq
    %v426 = vshrl.u32 %v425, 7
    %v427 = vsub.s32 0, %v426
    %v428 = vrot.slane %v423, %v427
    %vm429 = vcmask 39936
    %v431 = vsel %vm429, %v418, 0
    %vm433 = vcmask 1044480
    %v435 = vsel %vm433, %v417, 0
    %437 = vmatprep.subr.mxu0 0.0
    %438 = vmatpush1.msra.mxu0 %v435
    %439 = vmatprep.subr.mxu0 0.0
    %440 = vmatpush1.msra.mxu0 0.0
    %441 = vmatprep.subr.mxu0 0.0
    %442 = vmatpush1.msra.mxu0 0.0
    %443 = vmatprep.subr.mxu0 0.0
    %444 = vmatpush1.msra.mxu0 0.0
    %445 = vmatprep.subr.mxu0 0.0
    %446 = vmatpush1.msra.mxu0 0.0
    %447 = vmatprep.subr.mxu0 0.0
    %448 = vmatpush1.msra.mxu0 0.0
    %449 = vmatprep.subr.mxu0 0.0
    %450 = vmatpush1.msra.mxu0 0.0
    %451 = vmatprep.subr.mxu0 0.0
    %452 = vmatpush1.msra.mxu0 0.0
    %453 = vmatprep.subr.mxu0 0.0
    %454 = vmatpush1.msra.mxu0 0.0
    %455 = vmatprep.subr.mxu0 0.0
    %456 = vmatpush1.msra.mxu0 0.0
    %457 = vmatprep.subr.mxu0 0.0
    %458 = vmatpush1.msra.mxu0 0.0
    %459 = vmatprep.subr.mxu0 0.0
    %460 = vmatpush1.msra.mxu0 0.0
    %461 = vmatprep.subr.mxu0 0.0
    %462 = vmatpush1.msra.mxu0 0.0
    %463 = vmatprep.subr.mxu0 0.0
    %464 = vmatpush1.msra.mxu0 0.0
    %465 = vmatprep.subr.mxu0 0.0
    %466 = vmatpush1.msra.mxu0 0.0
    %467 = vmatprep.subr.mxu0 0.0
    %468 = vmatpush1.msra.mxu0 0.0
    %469 = vmatprep.subr.mxu0 0.0
    %470 = vmatpush1.msra.mxu0 0.0
    %471 = vmatprep.subr.mxu0 0.0
    %472 = vmatpush1.msra.mxu0 0.0
    %473 = vmatprep.subr.mxu0 0.0
    %474 = vmatpush1.msra.mxu0 0.0
    %475 = vmatprep.subr.mxu0 0.0
    %476 = vmatpush1.msra.mxu0 0.0
    %477 = vmatprep.subr.mxu0 0.0
    %478 = vmatpush1.msra.mxu0 0.0
    %479 = vmatprep.subr.mxu0 0.0
    %480 = vmatpush1.msra.mxu0 0.0
    %481 = vmatprep.subr.mxu0 0.0
    %482 = vmatpush1.msra.mxu0 0.0
    %483 = vmatprep.subr.mxu0 0.0
    %484 = vmatpush1.msra.mxu0 0.0
    %485 = vmatprep.subr.mxu0 0.0
    %486 = vmatpush1.msra.mxu0 0.0
    %487 = vmatprep.subr.mxu0 0.0
    %488 = vmatpush1.msra.mxu0 0.0
    %489 = vmatprep.subr.mxu0 0.0
    %490 = vmatpush1.msra.mxu0 0.0
    %491 = vmatprep.subr.mxu0 0.0
    %492 = vmatpush1.msra.mxu0 0.0
    %493 = vmatprep.subr.mxu0 0.0
    %494 = vmatpush1.msra.mxu0 0.0
    %495 = vmatprep.subr.mxu0 0.0
    %496 = vmatpush1.msra.mxu0 0.0
    %497 = vmatprep.subr.mxu0 0.0
    %498 = vmatpush1.msra.mxu0 0.0
    %499 = vmatprep.subr.mxu0 0.0
    %500 = vmatpush1.msra.mxu0 0.0
    %501 = vmatprep.mubr.f32.mxu0 0.0
    %502 = vmatmul.mubr.f32.gmra.mrb[0].mxu0 %v431
    %v503 = vpop.f32.mrb[0].mxu0
    %v504 = vadd.f32 %v428, %v503
    %v505 = vpop.f32.mrb[0].mxu0
    %506 = vdwg.mxu0
    %507 = vst [vmem:[#allocation6] sm:$0x1] %v504
    // Predicated region
    $region38: #{tpu_custom_call.1} parent=1 // pred_check
      _
    $region39: #{tpu_custom_call.1} parent=1 // pred_check_branch
      %509 = sbr.rel (0) target = $region41
    $region40: #{tpu_custom_call.1} parent=1 // pred_region
      %s511 = ssub.s32 16, 16
      %512 = vsyncadd [#allocation5], %s511
      %s514 = sshll.u32 [#allocation6], 4
      %s515 = int_to_ptr.vmem [resolvable:$true] %s514
      %517 = dma.vmem_to_hbm [thread:$0]  %s515, 16, %s8, [#allocation5]
    $region41: #{tpu_custom_call.1} parent=1 // pred_fallthru
      _
    // Predicated region
    $region42: #{tpu_custom_call.1} parent=1 // pred_check
      _
    $region43: #{tpu_custom_call.1} parent=1 // pred_check_branch
      %519 = sbr.rel (0) target = $region45
    $region44: #{tpu_custom_call.1} parent=1 // pred_region
      %520 = dma.done [#allocation5], 16
    $region45: #{tpu_custom_call.1} parent=1 // pred_fallthru
      _
    %521 = vsyncpa [#allocation4], 1
    %522 = vsyncpa [#allocation5], 1

</llo_original>
